<compile_context>
chip_gen: v5e
topology: v5e:2x2
jax: 0.10.0
libtpu: 0.0.40
codegen_flags: <defaults>
</compile_context>

<pallas_src>
import jax
import jax.numpy as jnp
from jax.experimental import pallas as pl
from jax.experimental.pallas import tpu as pltpu


def _round_up(v, m):
    return ((v + m - 1) // m) * m


def _pick_divisor(n, target, multiple):
    """Largest divisor of n that is <= target and a multiple of `multiple`
    (falls back to n itself: a full-extent block is always legal)."""
    for t in range(min(target, n), 0, -1):
        if n % t == 0 and t % multiple == 0:
            return t
    return n


def _phi_g_pool_kernel(x_ref, w_ref, b_ref, pg_ref):
    """Fused phi/g 1x1 conv + 2x2 max-pool.

    x_ref:  (1, 4, PT, Cp)  -- the four 2x2-window positions of PT pooled tokens
    w_ref:  (Cp, 2*Cip)     -- concatenated [w_phi | w_g] weights
    b_ref:  (1, 2*Cip)      -- concatenated biases
    pg_ref: (1, PT, 2*Cip)  -- concatenated [phi | g] outputs (pooled)
    """
    # max over the four window positions of the projected values == pool(conv(x))
    pg = jnp.dot(x_ref[0, 0], w_ref[...], preferred_element_type=jnp.float32)
    for pos in range(1, 4):
        pg = jnp.maximum(
            pg, jnp.dot(x_ref[0, pos], w_ref[...],
                        preferred_element_type=jnp.float32))
    pg_ref[0] = pg + b_ref[...]


def _attn_kernel(x_ref, pg_ref, wt_ref, bt_ref, ww_ref, shift_ref, out_ref):
    """theta (1/M folded in) + attention + (W conv * BN-scale) + shift + residual."""
    ci = wt_ref.shape[1]
    x = x_ref[0]                                                       # (TN, Cp)
    theta = jnp.dot(x, wt_ref[...],
                    preferred_element_type=jnp.float32) + bt_ref[...]  # (TN, Cip)
    phi = pg_ref[0, :, :ci]                                            # (M, Cip)
    g = pg_ref[0, :, ci:]                                              # (M, Cip)
    # f = theta . phi^T : contract the channel dims directly (no transpose).
    f = jax.lax.dot_general(theta, phi,
                            dimension_numbers=(((1,), (1,)), ((), ())),
                            preferred_element_type=jnp.float32)        # (TN, M)
    y = jnp.dot(f, g, preferred_element_type=jnp.float32)              # (TN, Cip)
    w_y = jnp.dot(y, ww_ref[...],
                  preferred_element_type=jnp.float32)                  # (TN, Cp)
    out_ref[0] = w_y + shift_ref[...] + x


def nonlocal_block_2d(x_nchw, params, eps=1e-5):
    """NonLocalBlockND (2-D, sub_sample=True, bn_layer=True) forward.

    x_nchw: (B, C, H, W) float32, H and W even (required by the 2x2 pool).
    """
    B, C, H, W = x_nchw.shape
    Ci = params["w_theta"].shape[0]
    N = H * W
    M = (H // 2) * (W // 2)
    Cp = _round_up(C, 128)
    Cip = _round_up(Ci, 128)
    f32 = jnp.float32

    # NCHW -> token-major (B, N, Cp), channels zero-padded to a lane multiple.
    x_tok = jnp.transpose(x_nchw, (0, 2, 3, 1)).reshape(B, N, C).astype(f32)
    x_tok = jnp.pad(x_tok, ((0, 0), (0, 0), (0, Cp - C)))

    # Window-position-major copy of x for the fused phi/g + max-pool kernel:
    # x_win[b, pos, m, c] is window position pos (TL/TR/BL/BR) of pooled token m.
    x_win = x_tok.reshape(B, H // 2, 2, W // 2, 2, Cp)
    x_win = jnp.transpose(x_win, (0, 2, 4, 1, 3, 5)).reshape(B, 4, M, Cp)

    def pack_w(w, rows, cols):
        wt = jnp.asarray(w, f32).T          # (in, out) for token-major matmul
        return jnp.pad(wt, ((0, rows - wt.shape[0]), (0, cols - wt.shape[1])))

    def pack_b(b, cols):
        b = jnp.asarray(b, f32).reshape(1, -1)
        return jnp.pad(b, ((0, 0), (0, cols - b.shape[1])))

    inv_m = 1.0 / M                          # fold the f / M scale into theta
    wt = pack_w(params["w_theta"], Cp, Cip) * inv_m
    bt = pack_b(params["b_theta"], Cip) * inv_m
    w_pg = jnp.concatenate([pack_w(params["w_phi"], Cp, Cip),
                            pack_w(params["w_g"], Cp, Cip)], axis=1)   # (Cp, 2Cip)
    b_pg = jnp.concatenate([pack_b(params["b_phi"], Cip),
                            pack_b(params["b_g"], Cip)], axis=1)       # (1, 2Cip)

    # Fold the W-conv bias and inference BatchNorm into the W weight + a shift:
    #   BN(conv(y)) = (y@ww + bw - mean)*scale + beta = y@(ww*scale) + shift
    scale_c = params["bn_gamma"] / jnp.sqrt(params["bn_var"] + eps)
    shift_c = (params["b_w"] - params["bn_mean"]) * scale_c + params["bn_beta"]
    ww = pack_w(params["w_w"], Cip, Cp) * pack_b(scale_c, Cp)          # (Cip, Cp)
    shift = pack_b(shift_c, Cp)                                        # (1, Cp)

    cparams = pltpu.CompilerParams(
        dimension_semantics=("parallel", "parallel"),
        vmem_limit_bytes=48 * 1024 * 1024)

    # ---- Kernel A: fused phi/g projection + 2x2 max-pool -------------------
    PT = _pick_divisor(M, 128, 8)
    pg_pool = pl.pallas_call(
        _phi_g_pool_kernel,
        out_shape=jax.ShapeDtypeStruct((B, M, 2 * Cip), f32),
        grid_spec=pltpu.PrefetchScalarGridSpec(
            num_scalar_prefetch=0,
            grid=(B, M // PT),
            in_specs=[
                pl.BlockSpec((1, 4, PT, Cp), lambda b, m: (b, 0, m, 0)),
                pl.BlockSpec((Cp, 2 * Cip), lambda b, m: (0, 0)),
                pl.BlockSpec((1, 2 * Cip), lambda b, m: (0, 0)),
            ],
            out_specs=pl.BlockSpec((1, PT, 2 * Cip), lambda b, m: (b, m, 0)),
        ),
        compiler_params=cparams,
    )(x_win, w_pg, b_pg)

    # ---- Kernel B: theta-on-the-fly attention + W conv + BN + residual -----
    TN = _pick_divisor(N, 512, 8)
    z_pad = pl.pallas_call(
        _attn_kernel,
        out_shape=jax.ShapeDtypeStruct((B, N, Cp), f32),
        grid_spec=pltpu.PrefetchScalarGridSpec(
            num_scalar_prefetch=0,
            grid=(B, N // TN),
            in_specs=[
                pl.BlockSpec((1, TN, Cp), lambda b, n: (b, n, 0)),
                pl.BlockSpec((1, M, 2 * Cip), lambda b, n: (b, 0, 0)),
                pl.BlockSpec((Cp, Cip), lambda b, n: (0, 0)),
                pl.BlockSpec((1, Cip), lambda b, n: (0, 0)),
                pl.BlockSpec((Cip, Cp), lambda b, n: (0, 0)),
                pl.BlockSpec((1, Cp), lambda b, n: (0, 0)),
            ],
            out_specs=pl.BlockSpec((1, TN, Cp), lambda b, n: (b, n, 0)),
        ),
        compiler_params=cparams,
    )(x_tok, pg_pool, wt, bt, ww, shift)

    z = z_pad[:, :, :C].reshape(B, H, W, C)
    return jnp.transpose(z, (0, 3, 1, 2))


def nonlocal_ref(x, params, eps=1e-5):
    """Pure-JAX reference mirroring the PyTorch forward (NCHW)."""
    B, C, H, W = x.shape
    P = jax.lax.Precision.HIGHEST

    def conv1x1(t, w, b):
        return jnp.einsum("oc,bchw->bohw", w, t, precision=P) + b[None, :, None, None]

    def pool(t):
        b_, c_, h_, w_ = t.shape
        return t.reshape(b_, c_, h_ // 2, 2, w_ // 2, 2).max(axis=(3, 5))

    g_x = pool(conv1x1(x, params["w_g"], params["b_g"]))
    g_x = g_x.reshape(B, g_x.shape[1], -1).transpose(0, 2, 1)           # (B, M, Ci)
    theta_x = conv1x1(x, params["w_theta"], params["b_theta"])
    theta_x = theta_x.reshape(B, theta_x.shape[1], -1).transpose(0, 2, 1)  # (B, N, Ci)
    phi_x = pool(conv1x1(x, params["w_phi"], params["b_phi"]))
    phi_x = phi_x.reshape(B, phi_x.shape[1], -1)                        # (B, Ci, M)

    f = jnp.einsum("bnc,bcm->bnm", theta_x, phi_x, precision=P)
    f = f / f.shape[-1]
    y = jnp.einsum("bnm,bmc->bnc", f, g_x, precision=P)
    y = y.transpose(0, 2, 1).reshape(B, -1, H, W)

    w_y = conv1x1(y, params["w_w"], params["b_w"])
    scale = params["bn_gamma"] / jnp.sqrt(params["bn_var"] + eps)
    w_y = ((w_y - params["bn_mean"][None, :, None, None])
           * scale[None, :, None, None]
           + params["bn_beta"][None, :, None, None])
    return w_y + x


if __name__ == "__main__":
    def make_params(key, C, Ci, nontrivial_bn=False):
        ks = jax.random.split(key, 10)
        p = {
            "w_theta": 0.1 * jax.random.normal(ks[0], (Ci, C), jnp.float32),
            "b_theta": 0.1 * jax.random.normal(ks[1], (Ci,), jnp.float32),
            "w_phi":   0.1 * jax.random.normal(ks[2], (Ci, C), jnp.float32),
            "b_phi":   0.1 * jax.random.normal(ks[3], (Ci,), jnp.float32),
            "w_g":     0.1 * jax.random.normal(ks[4], (Ci, C), jnp.float32),
            "b_g":     0.1 * jax.random.normal(ks[5], (Ci,), jnp.float32),
            "w_w":     0.1 * jax.random.normal(ks[6], (C, Ci), jnp.float32),
            "b_w":     0.1 * jax.random.normal(ks[7], (C,), jnp.float32),
            # Module-faithful init: BN weight/bias = 0 (zero-init non-local
            # branch), running stats at defaults; BN applied in inference form.
            "bn_gamma": jnp.zeros((C,), jnp.float32),
            "bn_beta":  jnp.zeros((C,), jnp.float32),
            "bn_mean":  jnp.zeros((C,), jnp.float32),
            "bn_var":   jnp.ones((C,), jnp.float32),
        }
        if nontrivial_bn:
            p["bn_gamma"] = 1.0 + 0.1 * jax.random.normal(ks[8], (C,), jnp.float32)
            p["bn_beta"] = jnp.full((C,), 0.05, jnp.float32)
        return p

    key = jax.random.PRNGKey(0)
    k_x1, k_p1, k_x2, k_p2 = jax.random.split(key, 4)

    # Test 1: module-consistent small shapes, module-faithful BN init.
    B, C, H, W = 2, 4, 16, 16
    Ci = C // 2
    x1 = jax.random.normal(k_x1, (B, C, H, W), jnp.float32)
    p1 = make_params(k_p1, C, Ci, nontrivial_bn=False)
    z1 = nonlocal_block_2d(x1, p1)
    jax.block_until_ready(z1)
    assert z1.shape == (B, C, H, W)
    assert bool(jnp.allclose(z1, nonlocal_ref(x1, p1), atol=2e-3, rtol=2e-3)), \
        "mismatch (module init)"

    # Test 2: non-trivial BN so the non-local branch is numerically exercised
    # (with the zero-init gamma the branch cancels in the output).
    p1b = make_params(k_p1, C, Ci, nontrivial_bn=True)
    z2 = nonlocal_block_2d(x1, p1b)
    jax.block_until_ready(z2)
    assert bool(jnp.allclose(z2, nonlocal_ref(x1, p1b), atol=2e-3, rtol=2e-3)), \
        "mismatch (non-trivial BN)"

    # Test 3: larger spatial size so both pallas_call grids are multi-tile
    # (M // PT = 2 and N // TN = 2), exercising the tiled index maps.
    B3, C3, H3, W3 = 1, 8, 32, 32
    Ci3 = C3 // 2
    x3 = jax.random.normal(k_x2, (B3, C3, H3, W3), jnp.float32)
    p3 = make_params(k_p2, C3, Ci3, nontrivial_bn=True)
    z3 = nonlocal_block_2d(x3, p3)
    jax.block_until_ready(z3)
    assert bool(jnp.allclose(z3, nonlocal_ref(x3, p3), atol=2e-3, rtol=2e-3)), \
        "mismatch (multi-tile)"

    print("KERNEL_OK")
</pallas_src>

<mosaic_0001>
module attributes {stable_mosaic.version = 11 : i64} {
  func.func @_phi_g_pool_kernel(%arg0: i32, %arg1: i32, %arg2: memref<1x4x64x128xf32, #tpu.memory_space<vmem>>, %arg3: memref<128x256xf32, #tpu.memory_space<vmem>>, %arg4: memref<1x256xf32, #tpu.memory_space<vmem>>, %arg5: memref<1x64x256xf32, #tpu.memory_space<vmem>>) attributes {dimension_semantics = [#tpu.dimension_semantics<parallel>, #tpu.dimension_semantics<parallel>], iteration_bounds = array<i64: 2, 1>, scalar_prefetch = 0 : i64, scratch_operands = 0 : i64, tpu.core_type = #tpu.core_type<tc>, window_params = [{transform_indices = @transform_0, window_bounds = array<i64: 1, 4, 64, 128>}, {pipeline_mode = #tpu.pipeline_mode<synchronous>, transform_indices = @transform_1, window_bounds = array<i64: 128, 256>}, {pipeline_mode = #tpu.pipeline_mode<synchronous>, transform_indices = @transform_2, window_bounds = array<i64: 1, 256>}, {transform_indices = @transform_3, window_bounds = array<i64: 1, 64, 256>}]} {
    %c0 = arith.constant 0 : index
    %c0_0 = arith.constant 0 : index
    %c0_1 = arith.constant 0 : index
    %c0_2 = arith.constant 0 : index
    %0 = vector.load %arg2[%c0, %c0_0, %c0_1, %c0_2] : memref<1x4x64x128xf32, #tpu.memory_space<vmem>>, vector<1x1x64x128xf32>
    %1 = vector.shape_cast %0 : vector<1x1x64x128xf32> to vector<64x128xf32>
    %c0_3 = arith.constant 0 : index
    %c0_4 = arith.constant 0 : index
    %2 = vector.load %arg3[%c0_3, %c0_4] : memref<128x256xf32, #tpu.memory_space<vmem>>, vector<128x256xf32>
    %cst = arith.constant dense<0.000000e+00> : vector<64x256xf32>
    %3 = tpu.matmul %1, %2, %cst {dimension_numbers = #tpu.dot_dimension_numbers<[1], [0], [0], [1], [0, 0, 1, 1], [], []>} : vector<64x128xf32>, vector<128x256xf32>, vector<64x256xf32> -> vector<64x256xf32>
    %c0_5 = arith.constant 0 : index
    %c1 = arith.constant 1 : index
    %c0_6 = arith.constant 0 : index
    %c0_7 = arith.constant 0 : index
    %4 = vector.load %arg2[%c0_5, %c1, %c0_6, %c0_7] : memref<1x4x64x128xf32, #tpu.memory_space<vmem>>, vector<1x1x64x128xf32>
    %5 = vector.shape_cast %4 : vector<1x1x64x128xf32> to vector<64x128xf32>
    %c0_8 = arith.constant 0 : index
    %c0_9 = arith.constant 0 : index
    %6 = vector.load %arg3[%c0_8, %c0_9] : memref<128x256xf32, #tpu.memory_space<vmem>>, vector<128x256xf32>
    %cst_10 = arith.constant dense<0.000000e+00> : vector<64x256xf32>
    %7 = tpu.matmul %5, %6, %cst_10 {dimension_numbers = #tpu.dot_dimension_numbers<[1], [0], [0], [1], [0, 0, 1, 1], [], []>} : vector<64x128xf32>, vector<128x256xf32>, vector<64x256xf32> -> vector<64x256xf32>
    %8 = arith.maximumf %3, %7 : vector<64x256xf32>
    %c0_11 = arith.constant 0 : index
    %c2 = arith.constant 2 : index
    %c0_12 = arith.constant 0 : index
    %c0_13 = arith.constant 0 : index
    %9 = vector.load %arg2[%c0_11, %c2, %c0_12, %c0_13] : memref<1x4x64x128xf32, #tpu.memory_space<vmem>>, vector<1x1x64x128xf32>
    %10 = vector.shape_cast %9 : vector<1x1x64x128xf32> to vector<64x128xf32>
    %c0_14 = arith.constant 0 : index
    %c0_15 = arith.constant 0 : index
    %11 = vector.load %arg3[%c0_14, %c0_15] : memref<128x256xf32, #tpu.memory_space<vmem>>, vector<128x256xf32>
    %cst_16 = arith.constant dense<0.000000e+00> : vector<64x256xf32>
    %12 = tpu.matmul %10, %11, %cst_16 {dimension_numbers = #tpu.dot_dimension_numbers<[1], [0], [0], [1], [0, 0, 1, 1], [], []>} : vector<64x128xf32>, vector<128x256xf32>, vector<64x256xf32> -> vector<64x256xf32>
    %13 = arith.maximumf %8, %12 : vector<64x256xf32>
    %c0_17 = arith.constant 0 : index
    %c3 = arith.constant 3 : index
    %c0_18 = arith.constant 0 : index
    %c0_19 = arith.constant 0 : index
    %14 = vector.load %arg2[%c0_17, %c3, %c0_18, %c0_19] : memref<1x4x64x128xf32, #tpu.memory_space<vmem>>, vector<1x1x64x128xf32>
    %15 = vector.shape_cast %14 : vector<1x1x64x128xf32> to vector<64x128xf32>
    %c0_20 = arith.constant 0 : index
    %c0_21 = arith.constant 0 : index
    %16 = vector.load %arg3[%c0_20, %c0_21] : memref<128x256xf32, #tpu.memory_space<vmem>>, vector<128x256xf32>
    %cst_22 = arith.constant dense<0.000000e+00> : vector<64x256xf32>
    %17 = tpu.matmul %15, %16, %cst_22 {dimension_numbers = #tpu.dot_dimension_numbers<[1], [0], [0], [1], [0, 0, 1, 1], [], []>} : vector<64x128xf32>, vector<128x256xf32>, vector<64x256xf32> -> vector<64x256xf32>
    %18 = arith.maximumf %13, %17 : vector<64x256xf32>
    %c0_23 = arith.constant 0 : index
    %c0_24 = arith.constant 0 : index
    %19 = vector.load %arg4[%c0_23, %c0_24] : memref<1x256xf32, #tpu.memory_space<vmem>>, vector<1x256xf32>
    %20 = vector.broadcast %19 : vector<1x256xf32> to vector<64x256xf32>
    %21 = arith.addf %18, %20 : vector<64x256xf32>
    %c0_25 = arith.constant 0 : index
    %c0_26 = arith.constant 0 : index
    %c0_27 = arith.constant 0 : index
    %22 = vector.load %arg5[%c0_25, %c0_26, %c0_27] : memref<1x64x256xf32, #tpu.memory_space<vmem>>, vector<1x64x256xf32>
    %23 = vector.shape_cast %22 : vector<1x64x256xf32> to vector<64x256xf32>
    %24 = vector.shape_cast %21 : vector<64x256xf32> to vector<1x64x256xf32>
    tpu.vector_store %arg5[%c0_25, %c0_26, %c0_27], %24 {strides = array<i32>} : memref<1x64x256xf32, #tpu.memory_space<vmem>>, vector<1x64x256xf32>,
    return
  }
  func.func @transform_0(%arg0: i32, %arg1: i32) -> (i32, i32, i32, i32) {
    %c0_i32 = arith.constant 0 : i32
    %c0_i32_0 = arith.constant 0 : i32
    %c0_i32_1 = arith.constant 0 : i32
    return %arg0, %c0_i32, %arg1, %c0_i32_0 : i32, i32, i32, i32
  }
  func.func @transform_1(%arg0: i32, %arg1: i32) -> (i32, i32) {
    %c0_i32 = arith.constant 0 : i32
    %c0_i32_0 = arith.constant 0 : i32
    %c0_i32_1 = arith.constant 0 : i32
    return %c0_i32, %c0_i32_0 : i32, i32
  }
  func.func @transform_2(%arg0: i32, %arg1: i32) -> (i32, i32) {
    %c0_i32 = arith.constant 0 : i32
    %c0_i32_0 = arith.constant 0 : i32
    %c0_i32_1 = arith.constant 0 : i32
    return %c0_i32, %c0_i32_0 : i32, i32
  }
  func.func @transform_3(%arg0: i32, %arg1: i32) -> (i32, i32, i32) {
    %c0_i32 = arith.constant 0 : i32
    %c0_i32_0 = arith.constant 0 : i32
    return %arg0, %arg1, %c0_i32 : i32, i32, i32
  }
}

</mosaic_0001>

<llo_original>
// kernel: tpu_custom_call.1
$region0: #{tpu_custom_call.1}
  #allocation0 [shape = 'u32[]', space=smem, size = 0x4, offset = 0x4, fixed_abs, tag = 'smem constant byte address 0x4 - core index']
  #allocation1 [shape = 'u32[72,128]{1,0:T(1,128)}', space=vmem, size = 0x9000, scoped, tag = 'internal scratch']
  %s0 = inlined_call_operand.hbm [shape: f32[2,4,64,128], index: 0, kind: input, shape index: {}]
  %s1 = inlined_call_operand.hbm [shape: f32[128,256], index: 1, kind: input, shape index: {}]
  %s2 = inlined_call_operand.hbm [shape: f32[1,256], index: 2, kind: input, shape index: {}]
  %s3 = inlined_call_operand.hbm [shape: f32[2,64,256], index: 3, kind: output, shape index: {}]
  %s4 = sld [smem:[#allocation0]]
  $region57: #{tpu_custom_call.1} parent=0
    _
  %s6 = ssub.s32 1, %s4
  %s7 = scalar_select 0, %s6, %s4
  $region1: #{tpu_custom_call.1} parent=0
    #allocation2 [shape = 'u8[262144]{0}', space=vmem, size = 0x40000, scoped, tag = 'input window, operand 0']
    #allocation3 [shape = 's32[2]{0}', space=sflag, size = 0x8, scoped, tag = 'scoped memory for tpu_custom_call.1']
    #allocation4 [shape = 's32[2]{0}', space=sflag, size = 0x8, scoped, tag = 'scoped memory for tpu_custom_call.1']
    #allocation5 [shape = 'u8[131072]{0}', space=vmem, size = 0x20000, scoped, tag = 'input window, operand 1, single buffered']
    #allocation6 [shape = 's32[1]{0}', space=sflag, size = 0x4, scoped, tag = 'scoped memory for tpu_custom_call.1']
    #allocation7 [shape = 'u8[1024]{0}', space=vmem, size = 0x400, scoped, tag = 'input window, operand 2, single buffered']
    #allocation8 [shape = 'u8[131072]{0}', space=vmem, size = 0x20000, scoped, tag = 'output window, operand 0']
    %8 = vsyncpa [#allocation3], 0
    %s9 = scalar_lea.sflag [#allocation3], 1
    %10 = vsyncpa %s9, 0
    %11 = vsyncpa [#allocation6], 0
    %12 = vsyncpa [#allocation4], 0
    %s13 = scalar_lea.sflag [#allocation4], 1
    %14 = vsyncpa %s13, 0
    loop: start=0, step=1, limit=4
    $region2: #{tpu_custom_call.1} parent=1 // loop_pre_header
      _
    $region3: #{tpu_custom_call.1} parent=1 // loop_header
      %s16 = sphi 0, %s20
      %p17 = scmp.ge.s32.totalorder %s16, 4
      %s23 = sphi 0, %s35
      %s24 = sphi 0, %s31
      %s25 = sphi 0, %s23
      %s26 = sphi 0, %s24
      %s27 = sphi 0, %s25
      %s28 = sphi 0, %s26
      %s40 = sphi 0, %s42
      %s43 = sphi 0, %s40
      %s44 = sphi 0, %s43
      %s60 = sphi 0, %s44
      %s64 = sphi 0, %s64
      %s66 = sphi 0, %s64
      %s67 = sphi 0, %s66
      %s81 = sphi 0, %s67
      %s85 = sphi 0, %s85
      %s87 = sphi 0, %s85
      %s88 = sphi 0, %s87
      %s102 = sphi 0, %s88
      %s110 = sphi 0, %s112
      %s113 = sphi 0, %s110
      %s114 = sphi 0, %s113
      %s130 = sphi 0, %s114
    $region4: #{tpu_custom_call.1} parent=1 // loop_header_branch
      %19 = sbr.rel (%p17) target = $region8
    $region5: #{tpu_custom_call.1} parent=1 // loop_body
      %s21 = ssub.s32 %s16, 1
      %s22 = ssub.s32 %s16, 2
      %s29 = sadd.s32 1, %s24
      %p30 = scmp.ge.s32.totalorder %s29, 1
      %s31 = scalar_select %p30, 0, %s29
      %s32 = sadd.s32 1, %s23
      %s33 = scalar_select %p30, %s32, %s23
      %p34 = scmp.ge.s32.totalorder %s33, 2
      %s35 = scalar_select %p34, 0, %s33
      %s36 = ssub.s32 %s23, %s35
      %s37 = ssub.s32 %s24, %s31
      %s38 = sor.u32 %s36, %s37
      %p39 = scmp.eq.s32.totalorder %s38, 0
      %s41 = sadd.s32 %s40, 1
      %s42 = scalar_select %p39, %s40, %s41
      %p45 = pneg %p39
      %p46 = scmp.eq.s32.totalorder %s16, 1
      %p47 = por %p45, %p46
      %p48 = scmp.ne.s32.totalorder %s40, %s43
      %p49 = scmp.eq.s32.totalorder %s16, 0
      %p50 = por %p48, %p49
      %p51 = scmp.ne.s32.totalorder %s40, %s43
      %p52 = scmp.eq.s32.totalorder %s21, 1
      %p53 = por %p51, %p52
      %p54 = scmp.ne.s32.totalorder %s43, %s44
      %p55 = scmp.eq.s32.totalorder %s21, 0
      %p56 = por %p54, %p55
      %p57 = scmp.ne.s32.totalorder %s43, %s44
      %p58 = scmp.eq.s32.totalorder %s22, 1
      %p59 = por %p57, %p58
      %p61 = scmp.ne.s32.totalorder %s44, %s60
      %p62 = scmp.eq.s32.totalorder %s22, 0
      %p63 = por %p61, %p62
      %s65 = sadd.s32 %s64, 1
      %p68 = scmp.eq.s32.totalorder %s16, 1
      %p69 = scmp.ne.s32.totalorder %s64, %s66
      %p70 = scmp.eq.s32.totalorder %s16, 0
      %p71 = por %p69, %p70
      %p72 = scmp.ne.s32.totalorder %s64, %s66
      %p73 = scmp.eq.s32.totalorder %s21, 1
      %p74 = por %p72, %p73
      %p75 = scmp.ne.s32.totalorder %s66, %s67
      %p76 = scmp.eq.s32.totalorder %s21, 0
      %p77 = por %p75, %p76
      %p78 = scmp.ne.s32.totalorder %s66, %s67
      %p79 = scmp.eq.s32.totalorder %s22, 1
      %p80 = por %p78, %p79
      %p82 = scmp.ne.s32.totalorder %s67, %s81
      %p83 = scmp.eq.s32.totalorder %s22, 0
      %p84 = por %p82, %p83
      %s86 = sadd.s32 %s85, 1
      %p89 = scmp.eq.s32.totalorder %s16, 1
      %p90 = scmp.ne.s32.totalorder %s85, %s87
      %p91 = scmp.eq.s32.totalorder %s16, 0
      %p92 = por %p90, %p91
      %p93 = scmp.ne.s32.totalorder %s85, %s87
      %p94 = scmp.eq.s32.totalorder %s21, 1
      %p95 = por %p93, %p94
      %p96 = scmp.ne.s32.totalorder %s87, %s88
      %p97 = scmp.eq.s32.totalorder %s21, 0
      %p98 = por %p96, %p97
      %p99 = scmp.ne.s32.totalorder %s87, %s88
      %p100 = scmp.eq.s32.totalorder %s22, 1
      %p101 = por %p99, %p100
      %p103 = scmp.ne.s32.totalorder %s88, %s102
      %p104 = scmp.eq.s32.totalorder %s22, 0
      %p105 = por %p103, %p104
      %s106 = ssub.s32 %s23, %s35
      %s107 = ssub.s32 %s24, %s31
      %s108 = sor.u32 %s106, %s107
      %p109 = scmp.eq.s32.totalorder %s108, 0
      %s111 = sadd.s32 %s110, 1
      %s112 = scalar_select %p109, %s110, %s111
      %p115 = pneg %p109
      %p116 = scmp.eq.s32.totalorder %s16, 1
      %p117 = por %p115, %p116
      %p118 = scmp.ne.s32.totalorder %s110, %s113
      %p119 = scmp.eq.s32.totalorder %s16, 0
      %p120 = por %p118, %p119
      %p121 = scmp.ne.s32.totalorder %s110, %s113
      %p122 = scmp.eq.s32.totalorder %s21, 1
      %p123 = por %p121, %p122
      %p124 = scmp.ne.s32.totalorder %s113, %s114
      %p125 = scmp.eq.s32.totalorder %s21, 0
      %p126 = por %p124, %p125
      %p127 = scmp.ne.s32.totalorder %s113, %s114
      %p128 = scmp.eq.s32.totalorder %s22, 1
      %p129 = por %p127, %p128
      %p131 = scmp.ne.s32.totalorder %s114, %s130
      %p132 = scmp.eq.s32.totalorder %s22, 0
      %p133 = por %p131, %p132
      %p134 = scmp.le.s32.totalorder 1, %s16
      %p135 = scmp.lt.s32.totalorder %s16, 3
      %p136 = pnand %p134, %p135
      %p137 = pneg %p136
      // Predicated region
      $region9: #{tpu_custom_call.1} parent=5 // pred_check
        _
      $region10: #{tpu_custom_call.1} parent=5 // pred_check_branch
        %139 = sbr.rel (%p136) target = $region12
      $region11: #{tpu_custom_call.1} parent=5 // pred_region
        %s140 = ssub.s32 %s16, 1
        // Predicated region
        $region13: #{tpu_custom_call.1} parent=11 // pred_check
          %p141 = pneg %p77
        $region14: #{tpu_custom_call.1} parent=11 // pred_check_branch
          %143 = sbr.rel (%p141) target = $region16
        $region15: #{tpu_custom_call.1} parent=11 // pred_region
          %145 = vsyncadd [#allocation6], 0
          %s146 = sshll.u32 %s1, 4
          %s147 = int_to_ptr.hbm [resolvable:$true] %s146
          %s148 = sshll.u32 [#allocation5], 4
          %s149 = int_to_ptr.vmem [resolvable:$true] %s148
          %154 = dma.hbm_to_vmem [thread:$0]  %s147, 4096, %s149, [#allocation6], 256, 256, 16
        $region16: #{tpu_custom_call.1} parent=11 // pred_fallthru
          _
        // Predicated region
        $region17: #{tpu_custom_call.1} parent=11 // pred_check
          %p155 = pneg %p98
        $region18: #{tpu_custom_call.1} parent=11 // pred_check_branch
          %157 = sbr.rel (%p155) target = $region20
        $region19: #{tpu_custom_call.1} parent=11 // pred_region
          %159 = vsyncadd [#allocation6], 0
          %s161 = sshll.u32 %s2, 4
          %s162 = int_to_ptr.hbm [resolvable:$true] %s161
          %s163 = sshll.u32 [#allocation7], 4
          %s164 = int_to_ptr.vmem [resolvable:$true] %s163
          %166 = dma.hbm_to_vmem [thread:$0]  %s162, 32, %s164, [#allocation6]
        $region20: #{tpu_custom_call.1} parent=11 // pred_fallthru
          _
      $region12: #{tpu_custom_call.1} parent=5 // pred_fallthru
        _
      %p167 = scmp.lt.s32.totalorder %s16, 2
      // Predicated region
      $region21: #{tpu_custom_call.1} parent=5 // pred_check
        %p168 = pneg %p167
      $region22: #{tpu_custom_call.1} parent=5 // pred_check_branch
        %170 = sbr.rel (%p168) target = $region24
      $region23: #{tpu_custom_call.1} parent=5 // pred_region
        // Predicated region
        $region25: #{tpu_custom_call.1} parent=23 // pred_check
          %p171 = pneg %p50
        $region26: #{tpu_custom_call.1} parent=23 // pred_check_branch
          %173 = sbr.rel (%p171) target = $region28
        $region27: #{tpu_custom_call.1} parent=23 // pred_region
          %s174 = sand.u32 %s40, 1
          %s175 = scalar_lea.sflag [#allocation3], %s174
          %s176 = sand.u32 %s40, 1
          %s177 = smul.addr %s176, 256
          %s178 = scalar_lea.vmem [#allocation2], %s177
          %s179 = smul.u32 8, %s24
          %181 = vsyncadd %s175, 0
          %s182 = smul.addr %s23, 32
          %s183 = sadd.s32 %s179, %s182
          %s184 = smul.addr %s183, 8
          %s185 = scalar_lea.hbm %s0, %s184
          %s186 = sshll.u32 %s185, 4
          %s187 = int_to_ptr.hbm [resolvable:$true] %s186
          %s188 = sshll.u32 %s178, 4
          %s189 = int_to_ptr.vmem [resolvable:$true] %s188
          %194 = dma.hbm_to_vmem [thread:$0]  %s187, 4096, %s189, %s175, 128, 128, 8
        $region28: #{tpu_custom_call.1} parent=23 // pred_fallthru
          _
      $region24: #{tpu_custom_call.1} parent=5 // pred_fallthru
        _
      %p195 = scmp.le.s32.totalorder 1, %s16
      %p196 = scmp.lt.s32.totalorder %s16, 3
      %p197 = pnand %p195, %p196
      %p198 = pneg %p197
      // Predicated region
      $region29: #{tpu_custom_call.1} parent=5 // pred_check
        _
      $region30: #{tpu_custom_call.1} parent=5 // pred_check_branch
        %200 = sbr.rel (%p197) target = $region32
      $region31: #{tpu_custom_call.1} parent=5 // pred_region
        %s201 = ssub.s32 %s16, 1
        %s202 = sand.u32 %s43, 1
        %s203 = scalar_lea.sflag [#allocation3], %s202
        %s204 = sand.u32 %s43, 1
        %s205 = smul.addr %s204, 256
        %s206 = scalar_lea.vmem [#allocation2], %s205
        // Predicated region
        $region33: #{tpu_custom_call.1} parent=31 // pred_check
          %p207 = pneg %p56
        $region34: #{tpu_custom_call.1} parent=31 // pred_check_branch
          %209 = sbr.rel (%p207) target = $region36
        $region35: #{tpu_custom_call.1} parent=31 // pred_region
          %211 = dma.done %s203, 4096
        $region36: #{tpu_custom_call.1} parent=31 // pred_fallthru
          _
        // Predicated region
        $region37: #{tpu_custom_call.1} parent=31 // pred_check
          %p212 = pneg %p77
        $region38: #{tpu_custom_call.1} parent=31 // pred_check_branch
          %214 = sbr.rel (%p212) target = $region40
        $region39: #{tpu_custom_call.1} parent=31 // pred_region
          %216 = dma.done [#allocation6], 4096
        $region40: #{tpu_custom_call.1} parent=31 // pred_fallthru
          _
        // Predicated region
        $region41: #{tpu_custom_call.1} parent=31 // pred_check
          %p217 = pneg %p98
        $region42: #{tpu_custom_call.1} parent=31 // pred_check_branch
          %219 = sbr.rel (%p217) target = $region44
        $region43: #{tpu_custom_call.1} parent=31 // pred_region
          %221 = dma.done [#allocation6], 32
        $region44: #{tpu_custom_call.1} parent=31 // pred_fallthru
          _
        %s222 = sand.u32 %s43, 1
        %s223 = scalar_lea.sflag [#allocation3], %s222
        %s224 = sand.u32 %s43, 1
        %s225 = smul.addr %s224, 256
        %s226 = scalar_lea.vmem [#allocation2], %s225
        %p227 = pneg %p56
        %p228 = pneg %p53
        %p229 = pneg %p77
        %p230 = pneg %p74
        %p231 = pneg %p98
        %p232 = pneg %p95
        %p233 = pneg %p126
        %p234 = pneg %p123
        %s235 = sand.u32 %s113, 1
        %s236 = scalar_lea.sflag [#allocation4], %s235
        %s237 = sand.u32 %s113, 1
        %s238 = smul.addr %s237, 128
        %s239 = scalar_lea.vmem [#allocation8], %s238
        %s240 = smul.u32 8, %s26
        %s241 = smul.u32 8, %s26
        %v242 = vld [vmem:[%s206] sm:$0xff]
        %v243 = vld [vmem:[%s206 + $0x8] sm:$0xff]
        %v244 = vld [vmem:[%s206 + $0x10] sm:$0xff]
        %v245 = vld [vmem:[%s206 + $0x18] sm:$0xff]
        %v246 = vld [vmem:[%s206 + $0x20] sm:$0xff]
        %v247 = vld [vmem:[%s206 + $0x28] sm:$0xff]
        %v248 = vld [vmem:[%s206 + $0x30] sm:$0xff]
        %v249 = vld [vmem:[%s206 + $0x38] sm:$0xff]
        %v250 = vld [vmem:[#allocation5] sm:$0xff]
        %v251 = vld [vmem:[#allocation5 + $0x8] sm:$0xff]
        %v252 = vld [vmem:[#allocation5 + $0x10] sm:$0xff]
        %v253 = vld [vmem:[#allocation5 + $0x18] sm:$0xff]
        %v254 = vld [vmem:[#allocation5 + $0x20] sm:$0xff]
        %v255 = vld [vmem:[#allocation5 + $0x28] sm:$0xff]
        %v256 = vld [vmem:[#allocation5 + $0x30] sm:$0xff]
        %v257 = vld [vmem:[#allocation5 + $0x38] sm:$0xff]
        %v258 = vld [vmem:[#allocation5 + $0x40] sm:$0xff]
        %v259 = vld [vmem:[#allocation5 + $0x48] sm:$0xff]
        %v260 = vld [vmem:[#allocation5 + $0x50] sm:$0xff]
        %v261 = vld [vmem:[#allocation5 + $0x58] sm:$0xff]
        %v262 = vld [vmem:[#allocation5 + $0x60] sm:$0xff]
        %v263 = vld [vmem:[#allocation5 + $0x68] sm:$0xff]
        %v264 = vld [vmem:[#allocation5 + $0x70] sm:$0xff]
        %v265 = vld [vmem:[#allocation5 + $0x78] sm:$0xff]
        %v266 = vld [vmem:[#allocation5 + $0x80] sm:$0xff]
        %v267 = vld [vmem:[#allocation5 + $0x88] sm:$0xff]
        %v268 = vld [vmem:[#allocation5 + $0x90] sm:$0xff]
        %v269 = vld [vmem:[#allocation5 + $0x98] sm:$0xff]
        %v270 = vld [vmem:[#allocation5 + $0xa0] sm:$0xff]
        %v271 = vld [vmem:[#allocation5 + $0xa8] sm:$0xff]
        %v272 = vld [vmem:[#allocation5 + $0xb0] sm:$0xff]
        %v273 = vld [vmem:[#allocation5 + $0xb8] sm:$0xff]
        %v274 = vld [vmem:[#allocation5 + $0xc0] sm:$0xff]
        %v275 = vld [vmem:[#allocation5 + $0xc8] sm:$0xff]
        %v276 = vld [vmem:[#allocation5 + $0xd0] sm:$0xff]
        %v277 = vld [vmem:[#allocation5 + $0xd8] sm:$0xff]
        %v278 = vld [vmem:[#allocation5 + $0xe0] sm:$0xff]
        %v279 = vld [vmem:[#allocation5 + $0xe8] sm:$0xff]
        %v280 = vld [vmem:[#allocation5 + $0xf0] sm:$0xff]
        %v281 = vld [vmem:[#allocation5 + $0xf8] sm:$0xff]
        %282 = vmatpush.msra.mxu0 %v280
        %283 = vmatpush.msra.mxu0 %v278
        %284 = vmatpush.msra.mxu0 %v276
        %285 = vmatpush.msra.mxu0 %v274
        %286 = vmatpush.msra.mxu0 %v272
        %287 = vmatpush.msra.mxu0 %v270
        %288 = vmatpush.msra.mxu0 %v268
        %289 = vmatpush.msra.mxu0 %v266
        %290 = vmatpush.msra.mxu0 %v264
        %291 = vmatpush.msra.mxu0 %v262
        %292 = vmatpush.msra.mxu0 %v260
        %293 = vmatpush.msra.mxu0 %v258
        %294 = vmatpush.msra.mxu0 %v256
        %295 = vmatpush.msra.mxu0 %v254
        %296 = vmatpush.msra.mxu0 %v252
        %297 = vmatpush.msra.mxu0 %v250
        %298 = vmatmul.f32.gmra.mxu0 %v242
        %v299 = vpop.f32.mrf.mxu0
        %v300 = vadd.f32 0.0, %v299
        %301 = vmatmul.f32.gmra.mxu0 %v243
        %v302 = vpop.f32.mrf.mxu0
        %v303 = vadd.f32 0.0, %v302
        %304 = vmatmul.f32.gmra.mxu0 %v244
        %v305 = vpop.f32.mrf.mxu0
        %v306 = vadd.f32 0.0, %v305
        %307 = vmatmul.f32.gmra.mxu0 %v245
        %v308 = vpop.f32.mrf.mxu0
        %v309 = vadd.f32 0.0, %v308
        %310 = vmatmul.f32.gmra.mxu0 %v246
        %v311 = vpop.f32.mrf.mxu0
        %v312 = vadd.f32 0.0, %v311
        %313 = vmatmul.f32.gmra.mxu0 %v247
        %v314 = vpop.f32.mrf.mxu0
        %v315 = vadd.f32 0.0, %v314
        %316 = vmatmul.f32.gmra.mxu0 %v248
        %v317 = vpop.f32.mrf.mxu0
        %v318 = vadd.f32 0.0, %v317
        %319 = vmatmul.f32.gmra.mxu0 %v249
        %v320 = vpop.f32.mrf.mxu0
        %v321 = vadd.f32 0.0, %v320
        %322 = vdwg.mxu0
        %323 = vmatpush.msra.mxu0 %v281
        %324 = vmatpush.msra.mxu0 %v279
        %325 = vmatpush.msra.mxu0 %v277
        %326 = vmatpush.msra.mxu0 %v275
        %327 = vmatpush.msra.mxu0 %v273
        %328 = vmatpush.msra.mxu0 %v271
        %329 = vmatpush.msra.mxu0 %v269
        %330 = vmatpush.msra.mxu0 %v267
        %331 = vmatpush.msra.mxu0 %v265
        %332 = vmatpush.msra.mxu0 %v263
        %333 = vmatpush.msra.mxu0 %v261
        %334 = vmatpush.msra.mxu0 %v259
        %335 = vmatpush.msra.mxu0 %v257
        %336 = vmatpush.msra.mxu0 %v255
        %337 = vmatpush.msra.mxu0 %v253
        %338 = vmatpush.msra.mxu0 %v251
        %339 = vmatmul.f32.gmra.mxu0 %v242
        %v340 = vpop.f32.mrf.mxu0
        %v341 = vadd.f32 0.0, %v340
        %342 = vmatmul.f32.gmra.mxu0 %v243
        %v343 = vpop.f32.mrf.mxu0
        %v344 = vadd.f32 0.0, %v343
        %345 = vmatmul.f32.gmra.mxu0 %v244
        %v346 = vpop.f32.mrf.mxu0
        %v347 = vadd.f32 0.0, %v346
        %348 = vmatmul.f32.gmra.mxu0 %v245
        %v349 = vpop.f32.mrf.mxu0
        %v350 = vadd.f32 0.0, %v349
        %351 = vmatmul.f32.gmra.mxu0 %v246
        %v352 = vpop.f32.mrf.mxu0
        %v353 = vadd.f32 0.0, %v352
        %354 = vmatmul.f32.gmra.mxu0 %v247
        %v355 = vpop.f32.mrf.mxu0
        %v356 = vadd.f32 0.0, %v355
        %357 = vmatmul.f32.gmra.mxu0 %v248
        %v358 = vpop.f32.mrf.mxu0
        %v359 = vadd.f32 0.0, %v358
        %360 = vmatmul.f32.gmra.mxu0 %v249
        %v361 = vpop.f32.mrf.mxu0
        %v362 = vadd.f32 0.0, %v361
        %363 = vdwg.mxu0
        %s364 = scalar_lea.vmem %s206, 64 [#allocation2]
        %v365 = vld [vmem:[%s364] sm:$0xff]
        %v366 = vld [vmem:[%s364 + $0x8] sm:$0xff]
        %v367 = vld [vmem:[%s364 + $0x10] sm:$0xff]
        %v368 = vld [vmem:[%s364 + $0x18] sm:$0xff]
        %v369 = vld [vmem:[%s364 + $0x20] sm:$0xff]
        %v370 = vld [vmem:[%s364 + $0x28] sm:$0xff]
        %v371 = vld [vmem:[%s364 + $0x30] sm:$0xff]
        %v372 = vld [vmem:[%s364 + $0x38] sm:$0xff]
        %373 = vmatpush.msra.mxu0 %v280
        %374 = vmatpush.msra.mxu0 %v278
        %375 = vmatpush.msra.mxu0 %v276
        %376 = vmatpush.msra.mxu0 %v274
        %377 = vmatpush.msra.mxu0 %v272
        %378 = vmatpush.msra.mxu0 %v270
        %379 = vmatpush.msra.mxu0 %v268
        %380 = vmatpush.msra.mxu0 %v266
        %381 = vmatpush.msra.mxu0 %v264
        %382 = vmatpush.msra.mxu0 %v262
        %383 = vmatpush.msra.mxu0 %v260
        %384 = vmatpush.msra.mxu0 %v258
        %385 = vmatpush.msra.mxu0 %v256
        %386 = vmatpush.msra.mxu0 %v254
        %387 = vmatpush.msra.mxu0 %v252
        %388 = vmatpush.msra.mxu0 %v250
        %389 = vmatmul.f32.gmra.mxu0 %v365
        %v390 = vpop.f32.mrf.mxu0
        %v391 = vadd.f32 0.0, %v390
        %392 = vmatmul.f32.gmra.mxu0 %v366
        %v393 = vpop.f32.mrf.mxu0
        %v394 = vadd.f32 0.0, %v393
        %395 = vmatmul.f32.gmra.mxu0 %v367
        %v396 = vpop.f32.mrf.mxu0
        %v397 = vadd.f32 0.0, %v396
        %398 = vmatmul.f32.gmra.mxu0 %v368
        %v399 = vpop.f32.mrf.mxu0
        %v400 = vadd.f32 0.0, %v399
        %401 = vmatmul.f32.gmra.mxu0 %v369
        %v402 = vpop.f32.mrf.mxu0
        %v403 = vadd.f32 0.0, %v402
        %404 = vmatmul.f32.gmra.mxu0 %v370
        %v405 = vpop.f32.mrf.mxu0
        %v406 = vadd.f32 0.0, %v405
        %407 = vmatmul.f32.gmra.mxu0 %v371
        %v408 = vpop.f32.mrf.mxu0
        %v409 = vadd.f32 0.0, %v408
        %410 = vmatmul.f32.gmra.mxu0 %v372
        %v411 = vpop.f32.mrf.mxu0
        %v412 = vadd.f32 0.0, %v411
        %413 = vdwg.mxu0
        %414 = vmatpush.msra.mxu0 %v281
        %415 = vmatpush.msra.mxu0 %v279
        %416 = vmatpush.msra.mxu0 %v277
        %417 = vmatpush.msra.mxu0 %v275
        %418 = vmatpush.msra.mxu0 %v273
        %419 = vmatpush.msra.mxu0 %v271
        %420 = vmatpush.msra.mxu0 %v269
        %421 = vmatpush.msra.mxu0 %v267
        %422 = vmatpush.msra.mxu0 %v265
        %423 = vmatpush.msra.mxu0 %v263
        %424 = vmatpush.msra.mxu0 %v261
        %425 = vmatpush.msra.mxu0 %v259
        %426 = vmatpush.msra.mxu0 %v257
        %427 = vmatpush.msra.mxu0 %v255
        %428 = vmatpush.msra.mxu0 %v253
        %429 = vmatpush.msra.mxu0 %v251
        %430 = vmatmul.f32.gmra.mxu0 %v365
        %v431 = vpop.f32.mrf.mxu0
        %v432 = vadd.f32 0.0, %v431
        %433 = vmatmul.f32.gmra.mxu0 %v366
        %v434 = vpop.f32.mrf.mxu0
        %v435 = vadd.f32 0.0, %v434
        %436 = vmatmul.f32.gmra.mxu0 %v367
        %v437 = vpop.f32.mrf.mxu0
        %v438 = vadd.f32 0.0, %v437
        %439 = vmatmul.f32.gmra.mxu0 %v368
        %v440 = vpop.f32.mrf.mxu0
        %v441 = vadd.f32 0.0, %v440
        %442 = vmatmul.f32.gmra.mxu0 %v369
        %v443 = vpop.f32.mrf.mxu0
        %v444 = vadd.f32 0.0, %v443
        %445 = vmatmul.f32.gmra.mxu0 %v370
        %v446 = vpop.f32.mrf.mxu0
        %v447 = vadd.f32 0.0, %v446
        %448 = vmatmul.f32.gmra.mxu0 %v371
        %v449 = vpop.f32.mrf.mxu0
        %v450 = vadd.f32 0.0, %v449
        %451 = vmatmul.f32.gmra.mxu0 %v372
        %v452 = vpop.f32.mrf.mxu0
        %v453 = vadd.f32 0.0, %v452
        %454 = vdwg.mxu0
        %v455 = vmax.f32 %v300, %v391
        %v456 = vmax.f32 %v341, %v432
        %v457 = vmax.f32 %v303, %v394
        %v458 = vmax.f32 %v344, %v435
        %v459 = vmax.f32 %v306, %v397
        %v460 = vmax.f32 %v347, %v438
        %v461 = vmax.f32 %v309, %v400
        %v462 = vmax.f32 %v350, %v441
        %v463 = vmax.f32 %v312, %v403
        %v464 = vmax.f32 %v353, %v444
        %v465 = vmax.f32 %v315, %v406
        %v466 = vmax.f32 %v356, %v447
        %v467 = vmax.f32 %v318, %v409
        %v468 = vmax.f32 %v359, %v450
        %v469 = vmax.f32 %v321, %v412
        %v470 = vmax.f32 %v362, %v453
        %s471 = scalar_lea.vmem %s206, 128 [#allocation2]
        %v472 = vld [vmem:[%s471] sm:$0xff]
        %v473 = vld [vmem:[%s471 + $0x8] sm:$0xff]
        %v474 = vld [vmem:[%s471 + $0x10] sm:$0xff]
        %v475 = vld [vmem:[%s471 + $0x18] sm:$0xff]
        %v476 = vld [vmem:[%s471 + $0x20] sm:$0xff]
        %v477 = vld [vmem:[%s471 + $0x28] sm:$0xff]
        %v478 = vld [vmem:[%s471 + $0x30] sm:$0xff]
        %v479 = vld [vmem:[%s471 + $0x38] sm:$0xff]
        %480 = vmatpush.msra.mxu0 %v280
        %481 = vmatpush.msra.mxu0 %v278
        %482 = vmatpush.msra.mxu0 %v276
        %483 = vmatpush.msra.mxu0 %v274
        %484 = vmatpush.msra.mxu0 %v272
        %485 = vmatpush.msra.mxu0 %v270
        %486 = vmatpush.msra.mxu0 %v268
        %487 = vmatpush.msra.mxu0 %v266
        %488 = vmatpush.msra.mxu0 %v264
        %489 = vmatpush.msra.mxu0 %v262
        %490 = vmatpush.msra.mxu0 %v260
        %491 = vmatpush.msra.mxu0 %v258
        %492 = vmatpush.msra.mxu0 %v256
        %493 = vmatpush.msra.mxu0 %v254
        %494 = vmatpush.msra.mxu0 %v252
        %495 = vmatpush.msra.mxu0 %v250
        %496 = vmatmul.f32.gmra.mxu0 %v472
        %v497 = vpop.f32.mrf.mxu0
        %v498 = vadd.f32 0.0, %v497
        %499 = vmatmul.f32.gmra.mxu0 %v473
        %v500 = vpop.f32.mrf.mxu0
        %v501 = vadd.f32 0.0, %v500
        %502 = vmatmul.f32.gmra.mxu0 %v474
        %v503 = vpop.f32.mrf.mxu0
        %v504 = vadd.f32 0.0, %v503
        %505 = vmatmul.f32.gmra.mxu0 %v475
        %v506 = vpop.f32.mrf.mxu0
        %v507 = vadd.f32 0.0, %v506
        %508 = vmatmul.f32.gmra.mxu0 %v476
        %v509 = vpop.f32.mrf.mxu0
        %v510 = vadd.f32 0.0, %v509
        %511 = vmatmul.f32.gmra.mxu0 %v477
        %v512 = vpop.f32.mrf.mxu0
        %v513 = vadd.f32 0.0, %v512
        %514 = vmatmul.f32.gmra.mxu0 %v478
        %v515 = vpop.f32.mrf.mxu0
        %v516 = vadd.f32 0.0, %v515
        %517 = vmatmul.f32.gmra.mxu0 %v479
        %v518 = vpop.f32.mrf.mxu0
        %v519 = vadd.f32 0.0, %v518
        %520 = vdwg.mxu0
        %521 = vmatpush.msra.mxu0 %v281
        %522 = vmatpush.msra.mxu0 %v279
        %523 = vmatpush.msra.mxu0 %v277
        %524 = vmatpush.msra.mxu0 %v275
        %525 = vmatpush.msra.mxu0 %v273
        %526 = vmatpush.msra.mxu0 %v271
        %527 = vmatpush.msra.mxu0 %v269
        %528 = vmatpush.msra.mxu0 %v267
        %529 = vmatpush.msra.mxu0 %v265
        %530 = vmatpush.msra.mxu0 %v263
        %531 = vmatpush.msra.mxu0 %v261
        %532 = vmatpush.msra.mxu0 %v259
        %533 = vmatpush.msra.mxu0 %v257
        %534 = vmatpush.msra.mxu0 %v255
        %535 = vmatpush.msra.mxu0 %v253
        %536 = vmatpush.msra.mxu0 %v251
        %537 = vmatmul.f32.gmra.mxu0 %v472
        %v538 = vpop.f32.mrf.mxu0
        %v539 = vadd.f32 0.0, %v538
        %540 = vmatmul.f32.gmra.mxu0 %v473
        %v541 = vpop.f32.mrf.mxu0
        %v542 = vadd.f32 0.0, %v541
        %543 = vmatmul.f32.gmra.mxu0 %v474
        %v544 = vpop.f32.mrf.mxu0
        %v545 = vadd.f32 0.0, %v544
        %546 = vmatmul.f32.gmra.mxu0 %v475
        %v547 = vpop.f32.mrf.mxu0
        %v548 = vadd.f32 0.0, %v547
        %549 = vmatmul.f32.gmra.mxu0 %v476
        %v550 = vpop.f32.mrf.mxu0
        %v551 = vadd.f32 0.0, %v550
        %552 = vmatmul.f32.gmra.mxu0 %v477
        %v553 = vpop.f32.mrf.mxu0
        %v554 = vadd.f32 0.0, %v553
        %555 = vmatmul.f32.gmra.mxu0 %v478
        %v556 = vpop.f32.mrf.mxu0
        %v557 = vadd.f32 0.0, %v556
        %558 = vmatmul.f32.gmra.mxu0 %v479
        %v559 = vpop.f32.mrf.mxu0
        %v560 = vadd.f32 0.0, %v559
        %561 = vdwg.mxu0
        %v562 = vmax.f32 %v455, %v498
        %v563 = vmax.f32 %v456, %v539
        %v564 = vmax.f32 %v457, %v501
        %v565 = vmax.f32 %v458, %v542
        %v566 = vmax.f32 %v459, %v504
        %v567 = vmax.f32 %v460, %v545
        %v568 = vmax.f32 %v461, %v507
        %v569 = vmax.f32 %v462, %v548
        %v570 = vmax.f32 %v463, %v510
        %v571 = vmax.f32 %v464, %v551
        %v572 = vmax.f32 %v465, %v513
        %v573 = vmax.f32 %v466, %v554
        %v574 = vmax.f32 %v467, %v516
        %v575 = vmax.f32 %v468, %v557
        %v576 = vmax.f32 %v469, %v519
        %v577 = vmax.f32 %v470, %v560
        %s578 = scalar_lea.vmem %s206, 192 [#allocation2]
        %v579 = vld [vmem:[%s578] sm:$0xff]
        %v580 = vld [vmem:[%s578 + $0x8] sm:$0xff]
        %v581 = vld [vmem:[%s578 + $0x10] sm:$0xff]
        %v582 = vld [vmem:[%s578 + $0x18] sm:$0xff]
        %v583 = vld [vmem:[%s578 + $0x20] sm:$0xff]
        %v584 = vld [vmem:[%s578 + $0x28] sm:$0xff]
        %v585 = vld [vmem:[%s578 + $0x30] sm:$0xff]
        %v586 = vld [vmem:[%s578 + $0x38] sm:$0xff]
        %587 = vmatpush.msra.mxu0 %v280
        %588 = vmatpush.msra.mxu0 %v278
        %589 = vmatpush.msra.mxu0 %v276
        %590 = vmatpush.msra.mxu0 %v274
        %591 = vmatpush.msra.mxu0 %v272
        %592 = vmatpush.msra.mxu0 %v270
        %593 = vmatpush.msra.mxu0 %v268
        %594 = vmatpush.msra.mxu0 %v266
        %595 = vmatpush.msra.mxu0 %v264
        %596 = vmatpush.msra.mxu0 %v262
        %597 = vmatpush.msra.mxu0 %v260
        %598 = vmatpush.msra.mxu0 %v258
        %599 = vmatpush.msra.mxu0 %v256
        %600 = vmatpush.msra.mxu0 %v254
        %601 = vmatpush.msra.mxu0 %v252
        %602 = vmatpush.msra.mxu0 %v250
        %603 = vmatmul.f32.gmra.mxu0 %v579
        %v604 = vpop.f32.mrf.mxu0
        %v605 = vadd.f32 0.0, %v604
        %606 = vmatmul.f32.gmra.mxu0 %v580
        %v607 = vpop.f32.mrf.mxu0
        %v608 = vadd.f32 0.0, %v607
        %609 = vmatmul.f32.gmra.mxu0 %v581
        %v610 = vpop.f32.mrf.mxu0
        %v611 = vadd.f32 0.0, %v610
        %612 = vmatmul.f32.gmra.mxu0 %v582
        %v613 = vpop.f32.mrf.mxu0
        %v614 = vadd.f32 0.0, %v613
        %615 = vmatmul.f32.gmra.mxu0 %v583
        %v616 = vpop.f32.mrf.mxu0
        %v617 = vadd.f32 0.0, %v616
        %618 = vmatmul.f32.gmra.mxu0 %v584
        %v619 = vpop.f32.mrf.mxu0
        %v620 = vadd.f32 0.0, %v619
        %621 = vmatmul.f32.gmra.mxu0 %v585
        %v622 = vpop.f32.mrf.mxu0
        %v623 = vadd.f32 0.0, %v622
        %624 = vmatmul.f32.gmra.mxu0 %v586
        %v625 = vpop.f32.mrf.mxu0
        %v626 = vadd.f32 0.0, %v625
        %627 = vdwg.mxu0
        %628 = vmatpush.msra.mxu0 %v281
        %629 = vmatpush.msra.mxu0 %v279
        %630 = vmatpush.msra.mxu0 %v277
        %631 = vmatpush.msra.mxu0 %v275
        %632 = vmatpush.msra.mxu0 %v273
        %633 = vmatpush.msra.mxu0 %v271
        %634 = vmatpush.msra.mxu0 %v269
        %635 = vmatpush.msra.mxu0 %v267
        %636 = vmatpush.msra.mxu0 %v265
        %637 = vmatpush.msra.mxu0 %v263
        %638 = vmatpush.msra.mxu0 %v261
        %639 = vmatpush.msra.mxu0 %v259
        %640 = vmatpush.msra.mxu0 %v257
        %641 = vmatpush.msra.mxu0 %v255
        %642 = vmatpush.msra.mxu0 %v253
        %643 = vmatpush.msra.mxu0 %v251
        %644 = vmatmul.f32.gmra.mxu0 %v579
        %v645 = vpop.f32.mrf.mxu0
        %v646 = vadd.f32 0.0, %v645
        %647 = vmatmul.f32.gmra.mxu0 %v580
        %v648 = vpop.f32.mrf.mxu0
        %v649 = vadd.f32 0.0, %v648
        %650 = vmatmul.f32.gmra.mxu0 %v581
        %v651 = vpop.f32.mrf.mxu0
        %v652 = vadd.f32 0.0, %v651
        %653 = vmatmul.f32.gmra.mxu0 %v582
        %v654 = vpop.f32.mrf.mxu0
        %v655 = vadd.f32 0.0, %v654
        %656 = vmatmul.f32.gmra.mxu0 %v583
        %v657 = vpop.f32.mrf.mxu0
        %v658 = vadd.f32 0.0, %v657
        %659 = vmatmul.f32.gmra.mxu0 %v584
        %v660 = vpop.f32.mrf.mxu0
        %v661 = vadd.f32 0.0, %v660
        %662 = vmatmul.f32.gmra.mxu0 %v585
        %v663 = vpop.f32.mrf.mxu0
        %v664 = vadd.f32 0.0, %v663
        %665 = vmatmul.f32.gmra.mxu0 %v586
        %v666 = vpop.f32.mrf.mxu0
        %v667 = vadd.f32 0.0, %v666
        %668 = vdwg.mxu0
        %v669 = vmax.f32 %v562, %v605
        %v670 = vmax.f32 %v563, %v646
        %v671 = vmax.f32 %v564, %v608
        %v672 = vmax.f32 %v565, %v649
        %v673 = vmax.f32 %v566, %v611
        %v674 = vmax.f32 %v567, %v652
        %v675 = vmax.f32 %v568, %v614
        %v676 = vmax.f32 %v569, %v655
        %v677 = vmax.f32 %v570, %v617
        %v678 = vmax.f32 %v571, %v658
        %v679 = vmax.f32 %v572, %v620
        %v680 = vmax.f32 %v573, %v661
        %v681 = vmax.f32 %v574, %v623
        %v682 = vmax.f32 %v575, %v664
        %v683 = vmax.f32 %v576, %v626
        %v684 = vmax.f32 %v577, %v667
        %v685 = vld [vmem:[#allocation7] sm:$0x3]
        %v687 = vperm.slane %v685, 0
        %v688 = vperm.slane %v685, 1
        %v691 = vadd.f32 %v669, %v687
        %v692 = vadd.f32 %v670, %v688
        %v693 = vadd.f32 %v671, %v687
        %v694 = vadd.f32 %v672, %v688
        %v695 = vadd.f32 %v673, %v687
        %v696 = vadd.f32 %v674, %v688
        %v697 = vadd.f32 %v675, %v687
        %v698 = vadd.f32 %v676, %v688
        %v699 = vadd.f32 %v677, %v687
        %v700 = vadd.f32 %v678, %v688
        %v701 = vadd.f32 %v679, %v687
        %v702 = vadd.f32 %v680, %v688
        %v703 = vadd.f32 %v681, %v687
        %v704 = vadd.f32 %v682, %v688
        %v705 = vadd.f32 %v683, %v687
        %v706 = vadd.f32 %v684, %v688
        %707 = vst [vmem:[%s239] sm:$0xff] %v691
        %708 = vst [vmem:[%s239 + $0x8] sm:$0xff] %v692
        %709 = vst [vmem:[%s239 + $0x10] sm:$0xff] %v693
        %710 = vst [vmem:[%s239 + $0x18] sm:$0xff] %v694
        %711 = vst [vmem:[%s239 + $0x20] sm:$0xff] %v695
        %712 = vst [vmem:[%s239 + $0x28] sm:$0xff] %v696
        %713 = vst [vmem:[%s239 + $0x30] sm:$0xff] %v697
        %714 = vst [vmem:[%s239 + $0x38] sm:$0xff] %v698
        %715 = vst [vmem:[%s239 + $0x40] sm:$0xff] %v699
        %716 = vst [vmem:[%s239 + $0x48] sm:$0xff] %v700
        %717 = vst [vmem:[%s239 + $0x50] sm:$0xff] %v701
        %718 = vst [vmem:[%s239 + $0x58] sm:$0xff] %v702
        %719 = vst [vmem:[%s239 + $0x60] sm:$0xff] %v703
        %720 = vst [vmem:[%s239 + $0x68] sm:$0xff] %v704
        %721 = vst [vmem:[%s239 + $0x70] sm:$0xff] %v705
        %722 = vst [vmem:[%s239 + $0x78] sm:$0xff] %v706
        %s723 = sand.u32 %s113, 1
        %s724 = scalar_lea.sflag [#allocation4], %s723
        %s725 = sand.u32 %s113, 1
        %s726 = smul.addr %s725, 128
        %s727 = scalar_lea.vmem [#allocation8], %s726
        // Predicated region
        $region45: #{tpu_custom_call.1} parent=31 // pred_check
          %p728 = pneg %p123
        $region46: #{tpu_custom_call.1} parent=31 // pred_check_branch
          %730 = sbr.rel (%p728) target = $region48
        $region47: #{tpu_custom_call.1} parent=31 // pred_region
          %s731 = smul.u32 8, %s26
          %733 = vsyncadd %s724, 0
          %s734 = smul.addr %s731, 2
          %s735 = smul.addr %s25, 16
          %s736 = sadd.s32 %s734, %s735
          %s737 = smul.addr %s736, 8
          %s738 = scalar_lea.hbm %s3, %s737
          %s739 = sshll.u32 %s727, 4
          %s740 = int_to_ptr.vmem [resolvable:$true] %s739
          %s741 = sshll.u32 %s738, 4
          %s742 = int_to_ptr.hbm [resolvable:$true] %s741
          %747 = dma.vmem_to_hbm [thread:$0]  %s740, 2048, %s742, %s724, 256, 256, 16
        $region48: #{tpu_custom_call.1} parent=31 // pred_fallthru
          _
      $region32: #{tpu_custom_call.1} parent=5 // pred_fallthru
        _
      %p748 = scmp.le.s32.totalorder 2, %s16
      // Predicated region
      $region49: #{tpu_custom_call.1} parent=5 // pred_check
        %p749 = pneg %p748
      $region50: #{tpu_custom_call.1} parent=5 // pred_check_branch
        %751 = sbr.rel (%p749) target = $region52
      $region51: #{tpu_custom_call.1} parent=5 // pred_region
        %s752 = ssub.s32 %s16, 2
        // Predicated region
        $region53: #{tpu_custom_call.1} parent=51 // pred_check
          %p753 = pneg %p129
        $region54: #{tpu_custom_call.1} parent=51 // pred_check_branch
          %755 = sbr.rel (%p753) target = $region56
        $region55: #{tpu_custom_call.1} parent=51 // pred_region
          %s756 = sand.u32 %s114, 1
          %s757 = scalar_lea.sflag [#allocation4], %s756
          %s758 = sand.u32 %s114, 1
          %s759 = smul.addr %s758, 128
          %s760 = scalar_lea.vmem [#allocation8], %s759
          %762 = dma.done %s757, 2048
        $region56: #{tpu_custom_call.1} parent=51 // pred_fallthru
          _
      $region52: #{tpu_custom_call.1} parent=5 // pred_fallthru
        _
    $region6: #{tpu_custom_call.1} parent=1 // loop_footer
      %s20 = sadd.s32 1, %s16
    $region7: #{tpu_custom_call.1} parent=1 // loop_footer_branch
      %15 = sbr.rel target = $region3
    $region8: #{tpu_custom_call.1} parent=1 // loop_exit
      _
    %763 = vsyncpa [#allocation3], 1
    %s764 = scalar_lea.sflag [#allocation3], 1
    %765 = vsyncpa %s764, 1
    %766 = vsyncpa [#allocation6], 1
    %767 = vsyncpa [#allocation4], 1
    %s768 = scalar_lea.sflag [#allocation4], 1
    %769 = vsyncpa %s768, 1

</llo_original>
